<compile_context>
chip_gen: v5e
topology: v5e:2x2
jax: 0.10.0
libtpu: 0.0.40
codegen_flags: <defaults>
</compile_context>

<pallas_src>
import functools

import jax
import jax.numpy as jnp
from jax.experimental import pallas as pl
from jax.experimental.pallas import tpu as pltpu


# TODO(synk): evolly's exact `round_filters` is not shown in the snippet; using
# plain nearest-integer rounding (the common interpretation for SE ratio sizing).
def round_filters(filters):
    return int(round(filters))


def _ceil_div(a, b):
    return -(-a // b)


def _se_kernel(x_ref, w1t_ref, w2t_ref, o_ref, *, inv_hw):
    """Fused SE block for one batch tile.

    x_ref  : (TB, C, HW)   input dtype (f32 or bf16)
    w1t_ref: (C, Cse)      transpose of nn.Linear(C, Cse).weight
    w2t_ref: (Cse, C)      transpose of nn.Linear(Cse, C).weight
    o_ref  : (TB, C, HW)   same dtype as x
    """
    # --- squeeze: global average pool over the (lane-mapped) spatial axis ---
    # f32 accumulation via the reduce's dtype (per-vreg upcast, no full-block
    # f32 copy).  The block spans the full HW axis so the mean is exact.
    pooled = jnp.sum(x_ref[...], axis=-1, dtype=jnp.float32) * inv_hw      # (TB, C)

    # --- excitation: Linear -> ReLU -> Linear -> Sigmoid (both bias-free) ---
    h = jnp.dot(pooled, w1t_ref[...].astype(jnp.float32),
                preferred_element_type=jnp.float32)                        # (TB, Cse)
    h = jnp.maximum(h, 0.0)
    s = jnp.dot(h, w2t_ref[...].astype(jnp.float32),
                preferred_element_type=jnp.float32)                        # (TB, C)
    s = jax.nn.sigmoid(s)

    # --- scale: re-read x_ref (short live range), multiply in native dtype ---
    gate = s.astype(o_ref.dtype)[:, :, None]                               # (TB, C, 1)
    o_ref[...] = x_ref[...] * gate


def se_block(x, w1, w2, *, min_grid_steps=4,
             vmem_budget_bytes=None, vmem_limit_bytes=None):
    """x: (B, C, H, W); w1: (Cse, C); w2: (C, Cse) — PyTorch nn.Linear layout."""
    B, C, H, W = x.shape
    Cse = w1.shape[0]
    HW = H * W

    x_flat = x.reshape(B, C, HW)
    w1t = jnp.asarray(w1).T   # (C, Cse)
    w2t = jnp.asarray(w2).T   # (Cse, C)

    # --- generation-aware VMEM budget ---------------------------------------
    try:
        vmem_cap = int(pltpu.get_tpu_info().vmem_capacity_bytes)
    except Exception:
        vmem_cap = 64 << 20   # conservative (v7x per-TensorCore); safe everywhere
    if vmem_limit_bytes is None:
        vmem_limit_bytes = (vmem_cap * 3) // 4       # 96 MiB on v5e/v6e, 48 MiB on v7x
    if vmem_budget_bytes is None:
        vmem_budget_bytes = vmem_limit_bytes // 2    # 48 MiB on v5e/v6e, 24 MiB on v7x

    itemsize = jnp.dtype(x.dtype).itemsize
    weight_bytes = (w1t.size + w2t.size) * jnp.dtype(w1t.dtype).itemsize

    # Per-image bytes: in-block + out-block, each double-buffered by the
    # pipeline (4x), plus one f32 temp's worth of headroom for any per-block
    # intermediate the compiler keeps live (matters for bf16 I/O).
    per_img = 4 * C * HW * itemsize + 4 * C * HW
    avail = max(0, vmem_budget_bytes - weight_bytes)
    fit_tb = max(1, avail // per_img)

    # Cap TB so the grid has at least ~min_grid_steps steps (pipelining + 2-TC
    # sharding); no divisibility requirement — ragged last block is safe.
    tb = int(max(1, min(fit_tb, _ceil_div(B, min_grid_steps), B)))
    # Prefer an even step count so v7x's two TensorCores get balanced halves.
    while tb > 1 and _ceil_div(B, tb) % 2 == 1:
        tb -= 1
    steps = _ceil_div(B, tb)

    # No-fit guard: even a single-image block must fit under the Mosaic limit.
    tb1_bytes = per_img + weight_bytes
    if tb1_bytes > vmem_limit_bytes:
        vmem_limit_bytes = min(tb1_bytes + (8 << 20), (vmem_cap * 7) // 8)
        # TODO(synk): if a single-image block exceeds physical VMEM, fall back
        # to a two-pass (pool pass + rescale pass) variant.

    cost = pl.CostEstimate(
        flops=2 * B * C * HW + 4 * B * C * Cse,   # pool + rescale + two tiny matmuls
        transcendentals=B * C,                    # sigmoid
        bytes_accessed=2 * B * C * HW * itemsize + weight_bytes,
    )

    kernel = functools.partial(_se_kernel, inv_hw=1.0 / HW)

    out_flat = pl.pallas_call(
        kernel,
        out_shape=jax.ShapeDtypeStruct((B, C, HW), x.dtype),
        grid_spec=pltpu.PrefetchScalarGridSpec(
            num_scalar_prefetch=0,
            grid=(steps,),
            in_specs=[
                pl.BlockSpec((tb, C, HW), lambda b: (b, 0, 0)),
                pl.BlockSpec((C, Cse), lambda b: (0, 0)),   # weights stay VMEM-resident
                pl.BlockSpec((Cse, C), lambda b: (0, 0)),
            ],
            out_specs=pl.BlockSpec((tb, C, HW), lambda b: (b, 0, 0)),
        ),
        compiler_params=pltpu.CompilerParams(
            dimension_semantics=("parallel",),      # batch rows are independent
            vmem_limit_bytes=int(vmem_limit_bytes),
        ),
        cost_estimate=cost,
    )(x_flat, w1t, w2t)

    return out_flat.reshape(B, C, H, W)


def se_block_ref(x, w1, w2):
    """Pure-JAX reference mirroring the PyTorch forward."""
    y = jnp.mean(x, axis=(2, 3))                 # AdaptiveAvgPool2d(1) + view
    y = jnp.maximum(y @ w1.T, 0.0)               # Linear (no bias) + ReLU
    y = jax.nn.sigmoid(y @ w2.T)                 # Linear (no bias) + Sigmoid
    return x * y[:, :, None, None]


if __name__ == "__main__":
    B, C, H, W = 2, 4, 16, 16
    se_ratio = 0.25
    Cse = max(2, int(round_filters(C * se_ratio)))  # = 2 for C=4

    key = jax.random.PRNGKey(0)
    kx, k1, k2 = jax.random.split(key, 3)

    x = jax.random.normal(kx, (B, C, H, W), dtype=jnp.float32)
    # nn.Linear weight shapes: (out_features, in_features), bias=False
    w1 = jax.random.normal(k1, (Cse, C), dtype=jnp.float32) * 0.1
    w2 = jax.random.normal(k2, (C, Cse), dtype=jnp.float32) * 0.1

    out = se_block(x, w1, w2)
    out = jax.block_until_ready(out)

    ref = se_block_ref(x, w1, w2)
    assert out.shape == (B, C, H, W)
    assert jnp.allclose(out, ref, atol=1e-5, rtol=1e-5), "mismatch vs reference"

    print("KERNEL_OK")
</pallas_src>

<mosaic_0001>
module attributes {stable_mosaic.version = 11 : i64} {
  func.func @_se_kernel(%arg0: i32, %arg1: memref<1x4x256xf32, #tpu.memory_space<vmem>>, %arg2: memref<4x2xf32, #tpu.memory_space<vmem>>, %arg3: memref<2x4xf32, #tpu.memory_space<vmem>>, %arg4: memref<1x4x256xf32, #tpu.memory_space<vmem>>) attributes {dimension_semantics = [#tpu.dimension_semantics<parallel>], iteration_bounds = array<i64: 2>, scalar_prefetch = 0 : i64, scratch_operands = 0 : i64, tpu.core_type = #tpu.core_type<tc>, window_params = [{transform_indices = @transform_0, window_bounds = array<i64: 1, 4, 256>}, {pipeline_mode = #tpu.pipeline_mode<synchronous>, transform_indices = @transform_1, window_bounds = array<i64: 4, 2>}, {pipeline_mode = #tpu.pipeline_mode<synchronous>, transform_indices = @transform_2, window_bounds = array<i64: 2, 4>}, {transform_indices = @transform_3, window_bounds = array<i64: 1, 4, 256>}]} {
    %c0 = arith.constant 0 : index
    %c0_0 = arith.constant 0 : index
    %c0_1 = arith.constant 0 : index
    %0 = vector.load %arg1[%c0, %c0_0, %c0_1] : memref<1x4x256xf32, #tpu.memory_space<vmem>>, vector<1x4x256xf32>
    %cst = arith.constant dense<0.000000e+00> : vector<1x4xf32>
    %1 = vector.multi_reduction <add>, %0, %cst [2] : vector<1x4x256xf32> to vector<1x4xf32>
    %cst_2 = arith.constant 3.906250e-03 : f32
    %2 = vector.broadcast %cst_2 : f32 to vector<1x4xf32>
    %3 = arith.mulf %1, %2 : vector<1x4xf32>
    %c0_3 = arith.constant 0 : index
    %c0_4 = arith.constant 0 : index
    %4 = vector.load %arg2[%c0_3, %c0_4] : memref<4x2xf32, #tpu.memory_space<vmem>>, vector<4x2xf32>
    %cst_5 = arith.constant dense<0.000000e+00> : vector<1x2xf32>
    %5 = tpu.matmul %3, %4, %cst_5 {dimension_numbers = #tpu.dot_dimension_numbers<[1], [0], [0], [1], [0, 0, 1, 1], [], []>} : vector<1x4xf32>, vector<4x2xf32>, vector<1x2xf32> -> vector<1x2xf32>
    %cst_6 = arith.constant 0.000000e+00 : f32
    %6 = vector.broadcast %cst_6 : f32 to vector<1x2xf32>
    %7 = arith.maximumf %5, %6 : vector<1x2xf32>
    %c0_7 = arith.constant 0 : index
    %c0_8 = arith.constant 0 : index
    %8 = vector.load %arg3[%c0_7, %c0_8] : memref<2x4xf32, #tpu.memory_space<vmem>>, vector<2x4xf32>
    %cst_9 = arith.constant dense<0.000000e+00> : vector<1x4xf32>
    %9 = tpu.matmul %7, %8, %cst_9 {dimension_numbers = #tpu.dot_dimension_numbers<[1], [0], [0], [1], [0, 0, 1, 1], [], []>} : vector<1x2xf32>, vector<2x4xf32>, vector<1x4xf32> -> vector<1x4xf32>
    %10 = arith.negf %9 : vector<1x4xf32>
    %11 = math.exp %10 : vector<1x4xf32>
    %cst_10 = arith.constant 1.000000e+00 : f32
    %12 = vector.broadcast %cst_10 : f32 to vector<1x4xf32>
    %13 = arith.addf %12, %11 : vector<1x4xf32>
    %14 = arith.divf %12, %13 : vector<1x4xf32>
    %15 = vector.shape_cast %14 : vector<1x4xf32> to vector<1x4x1xf32>
    %c0_11 = arith.constant 0 : index
    %c0_12 = arith.constant 0 : index
    %c0_13 = arith.constant 0 : index
    %16 = vector.load %arg1[%c0_11, %c0_12, %c0_13] : memref<1x4x256xf32, #tpu.memory_space<vmem>>, vector<1x4x256xf32>
    %17 = vector.broadcast %15 : vector<1x4x1xf32> to vector<1x4x256xf32>
    %18 = arith.mulf %16, %17 : vector<1x4x256xf32>
    %c0_14 = arith.constant 0 : index
    %c0_15 = arith.constant 0 : index
    %c0_16 = arith.constant 0 : index
    %19 = vector.load %arg4[%c0_14, %c0_15, %c0_16] : memref<1x4x256xf32, #tpu.memory_space<vmem>>, vector<1x4x256xf32>
    tpu.vector_store %arg4[%c0_14, %c0_15, %c0_16], %18 {strides = array<i32>} : memref<1x4x256xf32, #tpu.memory_space<vmem>>, vector<1x4x256xf32>,
    return
  }
  func.func @transform_0(%arg0: i32) -> (i32, i32, i32) {
    %c0_i32 = arith.constant 0 : i32
    %c0_i32_0 = arith.constant 0 : i32
    %c0_i32_1 = arith.constant 0 : i32
    return %arg0, %c0_i32, %c0_i32_0 : i32, i32, i32
  }
  func.func @transform_1(%arg0: i32) -> (i32, i32) {
    %c0_i32 = arith.constant 0 : i32
    %c0_i32_0 = arith.constant 0 : i32
    %c0_i32_1 = arith.constant 0 : i32
    return %c0_i32, %c0_i32_0 : i32, i32
  }
  func.func @transform_2(%arg0: i32) -> (i32, i32) {
    %c0_i32 = arith.constant 0 : i32
    %c0_i32_0 = arith.constant 0 : i32
    %c0_i32_1 = arith.constant 0 : i32
    return %c0_i32, %c0_i32_0 : i32, i32
  }
  func.func @transform_3(%arg0: i32) -> (i32, i32, i32) {
    %c0_i32 = arith.constant 0 : i32
    %c0_i32_0 = arith.constant 0 : i32
    %c0_i32_1 = arith.constant 0 : i32
    return %arg0, %c0_i32, %c0_i32_0 : i32, i32, i32
  }
}

</mosaic_0001>

<llo_original>
// kernel: tpu_custom_call.1
$region0: #{tpu_custom_call.1}
  #allocation0 [shape = 'u32[]', space=smem, size = 0x4, offset = 0x4, fixed_abs, tag = 'smem constant byte address 0x4 - core index']
  #allocation1 [shape = 'u32[72,128]{1,0:T(1,128)}', space=vmem, size = 0x9000, scoped, tag = 'internal scratch']
  %s0 = inlined_call_operand.hbm [shape: f32[2,4,256], index: 0, kind: input, shape index: {}]
  %s1 = inlined_call_operand.vmem [shape: f32[4,2], index: 1, kind: input, shape index: {}]
  %s2 = inlined_call_operand.vmem [shape: f32[2,4], index: 2, kind: input, shape index: {}]
  %s3 = inlined_call_operand.hbm [shape: f32[2,4,256], index: 3, kind: output, shape index: {}]
  %s4 = sld [smem:[#allocation0]]
  $region49: #{tpu_custom_call.1} parent=0
    _
  %s6 = ssub.s32 1, %s4
  %s7 = scalar_select 0, %s6, %s4
  $region1: #{tpu_custom_call.1} parent=0
    #allocation2 [shape = 'u8[8192]{0}', space=vmem, size = 0x2000, scoped, tag = 'input window, operand 0']
    #allocation3 [shape = 's32[2]{0}', space=sflag, size = 0x8, scoped, tag = 'scoped memory for tpu_custom_call.1']
    #allocation4 [shape = 's32[2]{0}', space=sflag, size = 0x8, scoped, tag = 'scoped memory for tpu_custom_call.1']
    #allocation5 [shape = 'u8[8192]{0}', space=vmem, size = 0x2000, scoped, tag = 'output window, operand 0']
    %8 = vsyncpa [#allocation3], 0
    %s9 = scalar_lea.sflag [#allocation3], 1
    %10 = vsyncpa %s9, 0
    %11 = vsyncpa [#allocation4], 0
    %s12 = scalar_lea.sflag [#allocation4], 1
    %13 = vsyncpa %s12, 0
    loop: start=0, step=1, limit=4
    $region2: #{tpu_custom_call.1} parent=1 // loop_pre_header
      _
    $region3: #{tpu_custom_call.1} parent=1 // loop_header
      %s15 = sphi 0, %s19
      %p16 = scmp.ge.s32.totalorder %s15, 4
      %s25 = sphi 0, %s27
      %s28 = sphi 0, %s25
      %s29 = sphi 0, %s28
      %s45 = sphi 0, %s29
      %s49 = sphi 0, %s49
      %s51 = sphi 0, %s49
      %s52 = sphi 0, %s51
      %s66 = sphi 0, %s52
      %s70 = sphi 0, %s70
      %s72 = sphi 0, %s70
      %s73 = sphi 0, %s72
      %s87 = sphi 0, %s73
      %s93 = sphi 0, %s95
      %s96 = sphi 0, %s93
      %s97 = sphi 0, %s96
      %s113 = sphi 0, %s97
    $region4: #{tpu_custom_call.1} parent=1 // loop_header_branch
      %18 = sbr.rel (%p16) target = $region8
    $region5: #{tpu_custom_call.1} parent=1 // loop_body
      %s20 = ssub.s32 %s15, 1
      %s21 = ssub.s32 %s15, 2
      %s22 = sadd.s32 %s15, 1
      %s23 = ssub.s32 %s15, %s22
      %p24 = scmp.eq.s32.totalorder %s23, 0
      %s26 = sadd.s32 %s25, 1
      %s27 = scalar_select %p24, %s25, %s26
      %p30 = pneg %p24
      %p31 = scmp.eq.s32.totalorder %s15, 1
      %p32 = por %p30, %p31
      %p33 = scmp.ne.s32.totalorder %s25, %s28
      %p34 = scmp.eq.s32.totalorder %s15, 0
      %p35 = por %p33, %p34
      %p36 = scmp.ne.s32.totalorder %s25, %s28
      %p37 = scmp.eq.s32.totalorder %s20, 1
      %p38 = por %p36, %p37
      %p39 = scmp.ne.s32.totalorder %s28, %s29
      %p40 = scmp.eq.s32.totalorder %s20, 0
      %p41 = por %p39, %p40
      %p42 = scmp.ne.s32.totalorder %s28, %s29
      %p43 = scmp.eq.s32.totalorder %s21, 1
      %p44 = por %p42, %p43
      %p46 = scmp.ne.s32.totalorder %s29, %s45
      %p47 = scmp.eq.s32.totalorder %s21, 0
      %p48 = por %p46, %p47
      %s50 = sadd.s32 %s49, 1
      %p53 = scmp.eq.s32.totalorder %s15, 1
      %p54 = scmp.ne.s32.totalorder %s49, %s51
      %p55 = scmp.eq.s32.totalorder %s15, 0
      %p56 = por %p54, %p55
      %p57 = scmp.ne.s32.totalorder %s49, %s51
      %p58 = scmp.eq.s32.totalorder %s20, 1
      %p59 = por %p57, %p58
      %p60 = scmp.ne.s32.totalorder %s51, %s52
      %p61 = scmp.eq.s32.totalorder %s20, 0
      %p62 = por %p60, %p61
      %p63 = scmp.ne.s32.totalorder %s51, %s52
      %p64 = scmp.eq.s32.totalorder %s21, 1
      %p65 = por %p63, %p64
      %p67 = scmp.ne.s32.totalorder %s52, %s66
      %p68 = scmp.eq.s32.totalorder %s21, 0
      %p69 = por %p67, %p68
      %s71 = sadd.s32 %s70, 1
      %p74 = scmp.eq.s32.totalorder %s15, 1
      %p75 = scmp.ne.s32.totalorder %s70, %s72
      %p76 = scmp.eq.s32.totalorder %s15, 0
      %p77 = por %p75, %p76
      %p78 = scmp.ne.s32.totalorder %s70, %s72
      %p79 = scmp.eq.s32.totalorder %s20, 1
      %p80 = por %p78, %p79
      %p81 = scmp.ne.s32.totalorder %s72, %s73
      %p82 = scmp.eq.s32.totalorder %s20, 0
      %p83 = por %p81, %p82
      %p84 = scmp.ne.s32.totalorder %s72, %s73
      %p85 = scmp.eq.s32.totalorder %s21, 1
      %p86 = por %p84, %p85
      %p88 = scmp.ne.s32.totalorder %s73, %s87
      %p89 = scmp.eq.s32.totalorder %s21, 0
      %p90 = por %p88, %p89
      %s91 = ssub.s32 %s15, %s22
      %p92 = scmp.eq.s32.totalorder %s91, 0
      %s94 = sadd.s32 %s93, 1
      %s95 = scalar_select %p92, %s93, %s94
      %p98 = pneg %p92
      %p99 = scmp.eq.s32.totalorder %s15, 1
      %p100 = por %p98, %p99
      %p101 = scmp.ne.s32.totalorder %s93, %s96
      %p102 = scmp.eq.s32.totalorder %s15, 0
      %p103 = por %p101, %p102
      %p104 = scmp.ne.s32.totalorder %s93, %s96
      %p105 = scmp.eq.s32.totalorder %s20, 1
      %p106 = por %p104, %p105
      %p107 = scmp.ne.s32.totalorder %s96, %s97
      %p108 = scmp.eq.s32.totalorder %s20, 0
      %p109 = por %p107, %p108
      %p110 = scmp.ne.s32.totalorder %s96, %s97
      %p111 = scmp.eq.s32.totalorder %s21, 1
      %p112 = por %p110, %p111
      %p114 = scmp.ne.s32.totalorder %s97, %s113
      %p115 = scmp.eq.s32.totalorder %s21, 0
      %p116 = por %p114, %p115
      %p117 = scmp.le.s32.totalorder 1, %s15
      %p118 = scmp.lt.s32.totalorder %s15, 3
      %p119 = pnand %p117, %p118
      %p120 = pneg %p119
      // Predicated region
      $region9: #{tpu_custom_call.1} parent=5 // pred_check
        _
      $region10: #{tpu_custom_call.1} parent=5 // pred_check_branch
        %122 = sbr.rel (%p119) target = $region12
      $region11: #{tpu_custom_call.1} parent=5 // pred_region
        %s123 = ssub.s32 %s15, 1
        // Predicated region
        $region13: #{tpu_custom_call.1} parent=11 // pred_check
          %p124 = pneg %p62
        $region14: #{tpu_custom_call.1} parent=11 // pred_check_branch
          %126 = sbr.rel (%p124) target = $region16
        $region15: #{tpu_custom_call.1} parent=11 // pred_region
          _
        $region16: #{tpu_custom_call.1} parent=11 // pred_fallthru
          _
        // Predicated region
        $region17: #{tpu_custom_call.1} parent=11 // pred_check
          %p127 = pneg %p83
        $region18: #{tpu_custom_call.1} parent=11 // pred_check_branch
          %129 = sbr.rel (%p127) target = $region20
        $region19: #{tpu_custom_call.1} parent=11 // pred_region
          _
        $region20: #{tpu_custom_call.1} parent=11 // pred_fallthru
          _
      $region12: #{tpu_custom_call.1} parent=5 // pred_fallthru
        _
      %p130 = scmp.lt.s32.totalorder %s15, 2
      // Predicated region
      $region21: #{tpu_custom_call.1} parent=5 // pred_check
        %p131 = pneg %p130
      $region22: #{tpu_custom_call.1} parent=5 // pred_check_branch
        %133 = sbr.rel (%p131) target = $region24
      $region23: #{tpu_custom_call.1} parent=5 // pred_region
        // Predicated region
        $region25: #{tpu_custom_call.1} parent=23 // pred_check
          %p134 = pneg %p35
        $region26: #{tpu_custom_call.1} parent=23 // pred_check_branch
          %136 = sbr.rel (%p134) target = $region28
        $region27: #{tpu_custom_call.1} parent=23 // pred_region
          %s137 = sand.u32 %s25, 1
          %s138 = scalar_lea.sflag [#allocation3], %s137
          %s139 = sand.u32 %s25, 1
          %s140 = smul.addr %s139, 8
          %s141 = scalar_lea.vmem [#allocation2], %s140
          %143 = vsyncadd %s138, 0
          %s144 = smul.addr %s15, 2
          %s145 = smul.addr %s144, 4
          %s146 = scalar_lea.hbm %s0, %s145
          %s148 = sshll.u32 %s146, 4
          %s149 = int_to_ptr.hbm [resolvable:$true] %s148
          %s150 = sshll.u32 %s141, 4
          %s151 = int_to_ptr.vmem [resolvable:$true] %s150
          %153 = dma.hbm_to_vmem [thread:$0]  %s149, 128, %s151, %s138
        $region28: #{tpu_custom_call.1} parent=23 // pred_fallthru
          _
      $region24: #{tpu_custom_call.1} parent=5 // pred_fallthru
        _
      %p154 = scmp.le.s32.totalorder 1, %s15
      %p155 = scmp.lt.s32.totalorder %s15, 3
      %p156 = pnand %p154, %p155
      %p157 = pneg %p156
      // Predicated region
      $region29: #{tpu_custom_call.1} parent=5 // pred_check
        _
      $region30: #{tpu_custom_call.1} parent=5 // pred_check_branch
        %159 = sbr.rel (%p156) target = $region32
      $region31: #{tpu_custom_call.1} parent=5 // pred_region
        %s160 = ssub.s32 %s15, 1
        %s161 = sand.u32 %s28, 1
        %s162 = scalar_lea.sflag [#allocation3], %s161
        %s163 = sand.u32 %s28, 1
        %s164 = smul.addr %s163, 8
        %s165 = scalar_lea.vmem [#allocation2], %s164
        // Predicated region
        $region33: #{tpu_custom_call.1} parent=31 // pred_check
          %p166 = pneg %p41
        $region34: #{tpu_custom_call.1} parent=31 // pred_check_branch
          %168 = sbr.rel (%p166) target = $region36
        $region35: #{tpu_custom_call.1} parent=31 // pred_region
          %170 = dma.done %s162, 128
        $region36: #{tpu_custom_call.1} parent=31 // pred_fallthru
          _
        %s171 = sand.u32 %s28, 1
        %s172 = scalar_lea.sflag [#allocation3], %s171
        %s173 = sand.u32 %s28, 1
        %s174 = smul.addr %s173, 8
        %s175 = scalar_lea.vmem [#allocation2], %s174
        %p176 = pneg %p41
        %p177 = pneg %p38
        %p178 = pneg %p62
        %p179 = pneg %p59
        %p180 = pneg %p83
        %p181 = pneg %p80
        %p182 = pneg %p109
        %p183 = pneg %p106
        %s184 = sand.u32 %s96, 1
        %s185 = scalar_lea.sflag [#allocation4], %s184
        %s186 = sand.u32 %s96, 1
        %s187 = smul.addr %s186, 8
        %s188 = scalar_lea.vmem [#allocation5], %s187
        %v189 = vld [vmem:[%s165] sm:$0xff]
        %191 = vst [vmem:[#allocation1] ss:$2 sm:$0xff] %v189
        %v192 = vld.sshfl [vmem:[#allocation1] sm:$0xff pattern:$0x75316420]
        %v193 = vld.sshfl [vmem:[#allocation1 + $0x8] sm:$0xff pattern:$0x75316420]
        %vm196 = vcmask 1043456
        %v197 = vsel %vm196, %v192, 0.0
        %v198 = vsel %vm196, %v193, 0.0
        %v199 = vadd.f32 %v197, %v198
        %200 = vadd.xlane.f32.xlu0 %v199
        %v201 = vpop.xlane.xlu0 %200
        %v202 = vmul.f32 %v201, 0.00390625
        %v203 = vld [vmem:[%s1] sm:$0xf]
        %v205 = vlaneseq
        %v206 = vand.u32 %v205, 127
        %v207 = vperm.slane %v202, %v206
        %vm208 = vcmask 31744
        %v209 = vsel %vm208, %v207, 0
        %v212 = vsel %vm196, %v203, 0
        %214 = vmatpush.msra.mxu0 0.0
        %215 = vmatpush.msra.mxu0 0.0
        %216 = vmatpush.msra.mxu0 0.0
        %217 = vmatpush.msra.mxu0 0.0
        %218 = vmatpush.msra.mxu0 0.0
        %219 = vmatpush.msra.mxu0 0.0
        %220 = vmatpush.msra.mxu0 0.0
        %221 = vmatpush.msra.mxu0 0.0
        %222 = vmatpush.msra.mxu0 0.0
        %223 = vmatpush.msra.mxu0 0.0
        %224 = vmatpush.msra.mxu0 0.0
        %225 = vmatpush.msra.mxu0 0.0
        %226 = vmatpush.msra.mxu0 0.0
        %227 = vmatpush.msra.mxu0 0.0
        %228 = vmatpush.msra.mxu0 0.0
        %229 = vmatpush.msra.mxu0 %v212
        %230 = vmatmul.f32.gmra.mxu0 %v209
        %v231 = vpop.f32.mrf.mxu0
        %v232 = vadd.f32 0.0, %v231
        %233 = vdwg.mxu0
        %v234 = vmax.f32 %v232, 0.0
        %v235 = vld [vmem:[%s2] sm:$0x3]
        %vm236 = vcmask 15360
        %v238 = vsel %vm236, %v234, 0
        %vm240 = vcmask 1041408
        %v242 = vsel %vm240, %v235, 0
        %244 = vmatpush.msra.mxu0 0.0
        %245 = vmatpush.msra.mxu0 0.0
        %246 = vmatpush.msra.mxu0 0.0
        %247 = vmatpush.msra.mxu0 0.0
        %248 = vmatpush.msra.mxu0 0.0
        %249 = vmatpush.msra.mxu0 0.0
        %250 = vmatpush.msra.mxu0 0.0
        %251 = vmatpush.msra.mxu0 0.0
        %252 = vmatpush.msra.mxu0 0.0
        %253 = vmatpush.msra.mxu0 0.0
        %254 = vmatpush.msra.mxu0 0.0
        %255 = vmatpush.msra.mxu0 0.0
        %256 = vmatpush.msra.mxu0 0.0
        %257 = vmatpush.msra.mxu0 0.0
        %258 = vmatpush.msra.mxu0 0.0
        %259 = vmatpush.msra.mxu0 %v242
        %260 = vmatmul.f32.gmra.mxu0 %v238
        %v261 = vpop.f32.mrf.mxu0
        %v262 = vadd.f32 0.0, %v261
        %263 = vdwg.mxu0
        %v264 = vxor.u32 %v262, 2147483648
        %v265 = vmul.f32 %v264, 1.442695
        %v266 = vpow.pop %v265
        %v267 = vadd.f32 %v266, 1.0
        %v268 = vrcp.pop %v267
        %v269 = vmul.f32 %v267, %v268
        %v270 = vsub.f32 1.0, %v269
        %v271 = vmul.f32 %v268, %v270
        %v272 = vadd.f32 %v268, %v271
        %vm273 = vweird.f32 %v267
        %vm274 = vweird.f32 %v268
        %vm275 = vmor %vm273, %vm274
        %v276 = vsel %vm275, %v268, %v272
        %v277 = vand.u32 2147483647, %v267
        %vm278 = vcmp.eq.f32.partialorder %v277, 8.507059e+37
        %v279 = vand.u32 %v267, 2147483648
        %v280 = vor.u32 1.1754944e-38, %v279
        %v281 = vsel %vm278, %v280, %v276
        %v282 = vmul.f32 1.0, %v281
        %v283 = vperm.slane %v282, 0
        %v284 = vlaneseq
        %v285 = vshrl.u32 %v284, 7
        %287 = vset.pattern.permute.xlu0 %v285
        %288 = vperm.xlu0 %287, %v283
        %v289 = vpop.permute.xlu0 %288
        %v292 = vunpack.c.l.s4 839922192
        %v293 = vunpack.c.0.s8 %v292
        %v294 = vperm.slane %v289, %v293
        %v296 = vmul.f32 %v189, %v294
        %297 = vst [vmem:[%s188] sm:$0xff] %v296
        %s298 = sand.u32 %s96, 1
        %s299 = scalar_lea.sflag [#allocation4], %s298
        %s300 = sand.u32 %s96, 1
        %s301 = smul.addr %s300, 8
        %s302 = scalar_lea.vmem [#allocation5], %s301
        // Predicated region
        $region37: #{tpu_custom_call.1} parent=31 // pred_check
          %p303 = pneg %p106
        $region38: #{tpu_custom_call.1} parent=31 // pred_check_branch
          %305 = sbr.rel (%p303) target = $region40
        $region39: #{tpu_custom_call.1} parent=31 // pred_region
          %307 = vsyncadd %s299, 0
          %s308 = smul.addr %s20, 2
          %s309 = smul.addr %s308, 4
          %s310 = scalar_lea.hbm %s3, %s309
          %s312 = sshll.u32 %s302, 4
          %s313 = int_to_ptr.vmem [resolvable:$true] %s312
          %s314 = sshll.u32 %s310, 4
          %s315 = int_to_ptr.hbm [resolvable:$true] %s314
          %317 = dma.vmem_to_hbm [thread:$0]  %s313, 128, %s315, %s299
        $region40: #{tpu_custom_call.1} parent=31 // pred_fallthru
          _
      $region32: #{tpu_custom_call.1} parent=5 // pred_fallthru
        _
      %p318 = scmp.le.s32.totalorder 2, %s15
      // Predicated region
      $region41: #{tpu_custom_call.1} parent=5 // pred_check
        %p319 = pneg %p318
      $region42: #{tpu_custom_call.1} parent=5 // pred_check_branch
        %321 = sbr.rel (%p319) target = $region44
      $region43: #{tpu_custom_call.1} parent=5 // pred_region
        %s322 = ssub.s32 %s15, 2
        // Predicated region
        $region45: #{tpu_custom_call.1} parent=43 // pred_check
          %p323 = pneg %p112
        $region46: #{tpu_custom_call.1} parent=43 // pred_check_branch
          %325 = sbr.rel (%p323) target = $region48
        $region47: #{tpu_custom_call.1} parent=43 // pred_region
          %s326 = sand.u32 %s97, 1
          %s327 = scalar_lea.sflag [#allocation4], %s326
          %s328 = sand.u32 %s97, 1
          %s329 = smul.addr %s328, 8
          %s330 = scalar_lea.vmem [#allocation5], %s329
          %332 = dma.done %s327, 128
        $region48: #{tpu_custom_call.1} parent=43 // pred_fallthru
          _
      $region44: #{tpu_custom_call.1} parent=5 // pred_fallthru
        _
    $region6: #{tpu_custom_call.1} parent=1 // loop_footer
      %s19 = sadd.s32 1, %s15
    $region7: #{tpu_custom_call.1} parent=1 // loop_footer_branch
      %14 = sbr.rel target = $region3
    $region8: #{tpu_custom_call.1} parent=1 // loop_exit
      _
    %333 = vsyncpa [#allocation3], 1
    %s334 = scalar_lea.sflag [#allocation3], 1
    %335 = vsyncpa %s334, 1
    %336 = vsyncpa [#allocation4], 1
    %s337 = scalar_lea.sflag [#allocation4], 1
    %338 = vsyncpa %s337, 1

</llo_original>
